<compile_context>
chip_gen: v6e
topology: v6e:2x2x1
jax: 0.10.0
libtpu: 0.0.40
codegen_flags: <defaults>
</compile_context>

<pallas_src>
import functools

import jax
import jax.numpy as jnp
from jax.experimental import pallas as pl
from jax.experimental.pallas import tpu as pltpu


def _yolo_loss_tile_kernel(pred_ref, targ_ref, out_ref, *, num_classes,
                           n_rows, tile_n, lambda_coord, lambda_noobj):
    p = pred_ref[...].astype(jnp.float32)          # (tile_n, D)
    t = targ_ref[...].astype(jnp.float32)
    tile, d = p.shape

    # Mask rows beyond the logical extent (only present when the last tile is
    # partial).  Zeroed rows land in the noobj mask but contribute exactly 0
    # to every loss term and to the object count.
    if n_rows % tile_n != 0:
        row = jax.lax.broadcasted_iota(jnp.int32, (tile, 1), 0)
        row_valid = (pl.program_id(0) * tile_n + row) < n_rows
        p = jnp.where(row_valid, p, 0.0)
        t = jnp.where(row_valid, t, 0.0)

    lane = jax.lax.broadcasted_iota(jnp.int32, (1, d), 1)      # (1, D)

    conf_t = t[:, 4:5]                             # (tile, 1)
    obj = conf_t > 0.0
    noobj = conf_t == 0.0
    obj_f = obj.astype(jnp.float32)
    noobj_f = noobj.astype(jnp.float32)

    diff = p - t
    sq = diff * diff

    # All three MSE terms in ONE lane reduction via a per-element weight:
    #   lanes 0..3 : lambda_coord                     on obj rows
    #   lane  4    : 1 on obj rows, lambda_noobj      on noobj rows
    w = (jnp.where(lane < 4, jnp.float32(lambda_coord) * obj_f, 0.0)
         + jnp.where(lane == 4,
                     obj_f + jnp.float32(lambda_noobj) * noobj_f, 0.0))
    lin_row = jnp.sum(w * sq, axis=1, keepdims=True)           # (tile, 1)

    # Cross-entropy over class lanes [5, 5+C) for obj rows.
    class_mask = jnp.logical_and(lane >= 5, lane < 5 + num_classes)
    neg_big = jnp.float32(-1e30)

    logits = jnp.where(class_mask, p, neg_big)
    row_max = jnp.max(logits, axis=1, keepdims=True)
    lse = row_max + jnp.log(
        jnp.sum(jnp.exp(logits - row_max), axis=1, keepdims=True))

    # argmax over target class scores (first max wins, matching torch.argmax)
    t_cls = jnp.where(class_mask, t, neg_big)
    t_max = jnp.max(t_cls, axis=1, keepdims=True)
    is_max = jnp.logical_and(t_cls == t_max, class_mask)
    argmax_lane = jnp.min(jnp.where(is_max, lane, jnp.int32(d + 1)),
                          axis=1, keepdims=True)
    picked = jnp.sum(jnp.where(lane == argmax_lane, p, 0.0), axis=1,
                     keepdims=True)
    ce_row = lse - picked                          # -log softmax(logits)[label]

    lin_part = jnp.sum(lin_row, axis=0, keepdims=True)                  # (1,1)
    ce_part = jnp.sum(jnp.where(obj, ce_row, 0.0), axis=0, keepdims=True)
    cnt_part = jnp.sum(obj_f, axis=0, keepdims=True)

    # Lane-dense (1, 128) partial-sum row: lane 0 = linear part,
    # lane 1 = CE sum, lane 2 = obj count, rest zero.
    out_lane = jax.lax.broadcasted_iota(jnp.int32, (1, out_ref.shape[1]), 1)
    out_ref[...] = (jnp.where(out_lane == 0, lin_part, 0.0)
                    + jnp.where(out_lane == 1, ce_part, 0.0)
                    + jnp.where(out_lane == 2, cnt_part, 0.0))


def yolo_loss_pallas(predictions, target, *, num_classes=90,
                     lambda_coord=5.0, lambda_noobj=0.5, tile_rows=1024):
    d = predictions.shape[-1]
    assert d == 5 + num_classes
    p = predictions.reshape(-1, d)     # free reshape, no dtype/pad copies
    t = target.reshape(-1, d)
    n = p.shape[0]

    tile_rows = max(8, (tile_rows // 8) * 8)       # keep sublane-aligned
    tile_n = n if n <= tile_rows else tile_rows    # full dim OR multiple of 8
    num_tiles = pl.cdiv(n, tile_n)

    kernel = functools.partial(_yolo_loss_tile_kernel,
                               num_classes=num_classes, n_rows=n,
                               tile_n=tile_n, lambda_coord=lambda_coord,
                               lambda_noobj=lambda_noobj)

    partials = pl.pallas_call(
        kernel,
        out_shape=jax.ShapeDtypeStruct((num_tiles, 128), jnp.float32),
        grid=(num_tiles,),
        in_specs=[
            pl.BlockSpec((tile_n, d), lambda i: (i, 0)),
            pl.BlockSpec((tile_n, d), lambda i: (i, 0)),
        ],
        out_specs=pl.BlockSpec((1, 128), lambda i: (i, 0)),
        compiler_params=pltpu.CompilerParams(
            dimension_semantics=("parallel",)),
    )(p, t)

    lin = jnp.sum(partials[:, 0])
    ce_sum = jnp.sum(partials[:, 1])
    n_obj = jnp.sum(partials[:, 2])
    # NOTE: matches torch semantics: NaN if the batch contains zero obj cells.
    return lin + ce_sum / n_obj


def yolo_loss_ref(predictions, target, *, num_classes=90,
                  lambda_coord=5.0, lambda_noobj=0.5):
    """Pure-JAX reference replicating the PyTorch forward (eager, unjitted)."""
    d = predictions.shape[-1]
    p = predictions.reshape(-1, d).astype(jnp.float32)
    t = target.reshape(-1, d).astype(jnp.float32)
    obj = t[:, 4] > 0
    noobj = t[:, 4] == 0
    loc = lambda_coord * jnp.sum((p[obj][:, 0:4] - t[obj][:, 0:4]) ** 2)
    cobj = jnp.sum((p[obj][:, 4] - t[obj][:, 4]) ** 2)
    cnoobj = lambda_noobj * jnp.sum((p[noobj][:, 4] - t[noobj][:, 4]) ** 2)
    logits = p[obj][:, 5:5 + num_classes]
    labels = jnp.argmax(t[obj][:, 5:5 + num_classes], axis=-1)
    logp = jax.nn.log_softmax(logits, axis=-1)
    ce = -jnp.mean(jnp.take_along_axis(logp, labels[:, None], axis=-1))
    return loc + cobj + cnoobj + ce


if __name__ == "__main__":
    S, C = 7, 90
    batch = 2
    D = 5 + C

    key = jax.random.PRNGKey(0)
    k_pred, k_xy, k_conf, k_cls = jax.random.split(key, 4)

    predictions = jax.random.normal(k_pred, (batch, S, S, D), jnp.float32)

    # YOLO-style target: box coords in [0,1], conf in {0,1}, class scores.
    coords = jax.random.uniform(k_xy, (batch, S, S, 4), jnp.float32)
    conf = jax.random.bernoulli(k_conf, 0.3, (batch, S, S, 1)).astype(jnp.float32)
    cls = jax.random.uniform(k_cls, (batch, S, S, C), jnp.float32)
    target = jnp.concatenate([coords, conf, cls], axis=-1)

    loss = yolo_loss_pallas(predictions, target)
    loss = jax.block_until_ready(loss)

    ref = yolo_loss_ref(predictions, target)
    assert jnp.isfinite(loss), "kernel produced non-finite loss"
    assert jnp.allclose(loss, ref, rtol=1e-5, atol=1e-3), (loss, ref)

    print("KERNEL_OK")
</pallas_src>

<mosaic_0001>
module attributes {stable_mosaic.version = 11 : i64} {
  func.func @_yolo_loss_tile_kernel(%arg0: i32, %arg1: memref<98x95xf32, #tpu.memory_space<vmem>>, %arg2: memref<98x95xf32, #tpu.memory_space<vmem>>, %arg3: memref<1x128xf32, #tpu.memory_space<vmem>>) attributes {dimension_semantics = [#tpu.dimension_semantics<parallel>], iteration_bounds = array<i64: 1>, scalar_prefetch = 0 : i64, scratch_operands = 0 : i64, tpu.core_type = #tpu.core_type<tc>, window_params = [{transform_indices = @transform_0, window_bounds = array<i64: 98, 95>}, {transform_indices = @transform_1, window_bounds = array<i64: 98, 95>}, {transform_indices = @transform_2, window_bounds = array<i64: 1, 128>}]} {
    %c0 = arith.constant 0 : index
    %c0_0 = arith.constant 0 : index
    %0 = vector.load %arg1[%c0, %c0_0] : memref<98x95xf32, #tpu.memory_space<vmem>>, vector<98x95xf32>
    %c0_1 = arith.constant 0 : index
    %c0_2 = arith.constant 0 : index
    %1 = vector.load %arg2[%c0_1, %c0_2] : memref<98x95xf32, #tpu.memory_space<vmem>>, vector<98x95xf32>
    %2 = tpu.iota {dimensions = array<i32: 1>} : vector<1x95xi32>
    %3 = vector.extract_strided_slice %1 {offsets = [0, 4], sizes = [98, 1], strides = [1, 1]} : vector<98x95xf32> to vector<98x1xf32>
    %cst = arith.constant 0.000000e+00 : f32
    %4 = vector.broadcast %cst : f32 to vector<98x1xf32>
    %5 = arith.cmpf ogt, %3, %4 : vector<98x1xf32>
    %cst_3 = arith.constant 0.000000e+00 : f32
    %6 = vector.broadcast %cst_3 : f32 to vector<98x1xf32>
    %7 = arith.cmpf oeq, %3, %6 : vector<98x1xf32>
    %8 = arith.extui %5 : vector<98x1xi1> to vector<98x1xi32>
    %9 = arith.sitofp %8 : vector<98x1xi32> to vector<98x1xf32>
    %10 = arith.extui %7 : vector<98x1xi1> to vector<98x1xi32>
    %11 = arith.sitofp %10 : vector<98x1xi32> to vector<98x1xf32>
    %12 = arith.subf %0, %1 : vector<98x95xf32>
    %13 = arith.mulf %12, %12 : vector<98x95xf32>
    %c4_i32 = arith.constant 4 : i32
    %14 = vector.broadcast %c4_i32 : i32 to vector<1x95xi32>
    %15 = arith.cmpi slt, %2, %14 : vector<1x95xi32>
    %cst_4 = arith.constant 5.000000e+00 : f32
    %16 = vector.broadcast %cst_4 : f32 to vector<98x1xf32>
    %17 = arith.mulf %16, %9 : vector<98x1xf32>
    %cst_5 = arith.constant 0.000000e+00 : f32
    %18 = vector.shape_cast %15 : vector<1x95xi1> to vector<1x95xi1>
    %19 = vector.broadcast %18 : vector<1x95xi1> to vector<98x95xi1>
    %20 = vector.shape_cast %17 : vector<98x1xf32> to vector<98x1xf32>
    %21 = vector.broadcast %20 : vector<98x1xf32> to vector<98x95xf32>
    %22 = vector.broadcast %cst_5 : f32 to vector<98x95xf32>
    %23 = arith.select %19, %21, %22 : vector<98x95xi1>, vector<98x95xf32>
    %c4_i32_6 = arith.constant 4 : i32
    %24 = vector.broadcast %c4_i32_6 : i32 to vector<1x95xi32>
    %25 = arith.cmpi eq, %2, %24 : vector<1x95xi32>
    %cst_7 = arith.constant 5.000000e-01 : f32
    %26 = vector.broadcast %cst_7 : f32 to vector<98x1xf32>
    %27 = arith.mulf %26, %11 : vector<98x1xf32>
    %28 = arith.addf %9, %27 : vector<98x1xf32>
    %cst_8 = arith.constant 0.000000e+00 : f32
    %29 = vector.shape_cast %25 : vector<1x95xi1> to vector<1x95xi1>
    %30 = vector.broadcast %29 : vector<1x95xi1> to vector<98x95xi1>
    %31 = vector.shape_cast %28 : vector<98x1xf32> to vector<98x1xf32>
    %32 = vector.broadcast %31 : vector<98x1xf32> to vector<98x95xf32>
    %33 = vector.broadcast %cst_8 : f32 to vector<98x95xf32>
    %34 = arith.select %30, %32, %33 : vector<98x95xi1>, vector<98x95xf32>
    %35 = arith.addf %23, %34 : vector<98x95xf32>
    %36 = arith.mulf %35, %13 : vector<98x95xf32>
    %cst_9 = arith.constant dense<0.000000e+00> : vector<98xf32>
    %37 = vector.multi_reduction <add>, %36, %cst_9 [1] : vector<98x95xf32> to vector<98xf32>
    %38 = vector.shape_cast %37 : vector<98xf32> to vector<98x1xf32>
    %c5_i32 = arith.constant 5 : i32
    %39 = vector.broadcast %c5_i32 : i32 to vector<1x95xi32>
    %40 = arith.cmpi sge, %2, %39 : vector<1x95xi32>
    %c95_i32 = arith.constant 95 : i32
    %41 = vector.broadcast %c95_i32 : i32 to vector<1x95xi32>
    %42 = arith.cmpi slt, %2, %41 : vector<1x95xi32>
    %43 = arith.andi %40, %42 : vector<1x95xi1>
    %cst_10 = arith.constant -1.000000e+30 : f32
    %44 = vector.shape_cast %43 : vector<1x95xi1> to vector<1x95xi1>
    %45 = vector.broadcast %44 : vector<1x95xi1> to vector<98x95xi1>
    %46 = vector.broadcast %cst_10 : f32 to vector<98x95xf32>
    %47 = arith.select %45, %0, %46 : vector<98x95xi1>, vector<98x95xf32>
    %cst_11 = arith.constant dense<0xFF800000> : vector<98xf32>
    %48 = vector.multi_reduction <maximumf>, %47, %cst_11 [1] : vector<98x95xf32> to vector<98xf32>
    %49 = vector.shape_cast %48 : vector<98xf32> to vector<98x1xf32>
    %50 = vector.broadcast %49 : vector<98x1xf32> to vector<98x95xf32>
    %51 = arith.subf %47, %50 : vector<98x95xf32>
    %52 = math.exp %51 : vector<98x95xf32>
    %cst_12 = arith.constant dense<0.000000e+00> : vector<98xf32>
    %53 = vector.multi_reduction <add>, %52, %cst_12 [1] : vector<98x95xf32> to vector<98xf32>
    %54 = vector.shape_cast %53 : vector<98xf32> to vector<98x1xf32>
    %55 = math.log %54 : vector<98x1xf32>
    %56 = arith.addf %49, %55 : vector<98x1xf32>
    %cst_13 = arith.constant -1.000000e+30 : f32
    %57 = vector.shape_cast %43 : vector<1x95xi1> to vector<1x95xi1>
    %58 = vector.broadcast %57 : vector<1x95xi1> to vector<98x95xi1>
    %59 = vector.broadcast %cst_13 : f32 to vector<98x95xf32>
    %60 = arith.select %58, %1, %59 : vector<98x95xi1>, vector<98x95xf32>
    %cst_14 = arith.constant dense<0xFF800000> : vector<98xf32>
    %61 = vector.multi_reduction <maximumf>, %60, %cst_14 [1] : vector<98x95xf32> to vector<98xf32>
    %62 = vector.shape_cast %61 : vector<98xf32> to vector<98x1xf32>
    %63 = vector.broadcast %62 : vector<98x1xf32> to vector<98x95xf32>
    %64 = arith.cmpf oeq, %60, %63 : vector<98x95xf32>
    %65 = vector.broadcast %43 : vector<1x95xi1> to vector<98x95xi1>
    %66 = arith.andi %64, %65 : vector<98x95xi1>
    %c96_i32 = arith.constant 96 : i32
    %67 = vector.shape_cast %2 : vector<1x95xi32> to vector<1x95xi32>
    %68 = vector.broadcast %67 : vector<1x95xi32> to vector<98x95xi32>
    %69 = vector.broadcast %c96_i32 : i32 to vector<98x95xi32>
    %70 = arith.select %66, %68, %69 : vector<98x95xi1>, vector<98x95xi32>
    %cst_15 = arith.constant dense<2147483647> : vector<98xi32>
    %71 = vector.multi_reduction <minsi>, %70, %cst_15 [1] : vector<98x95xi32> to vector<98xi32>
    %72 = vector.shape_cast %71 : vector<98xi32> to vector<98x1xi32>
    %73 = vector.broadcast %2 : vector<1x95xi32> to vector<98x95xi32>
    %74 = vector.broadcast %72 : vector<98x1xi32> to vector<98x95xi32>
    %75 = arith.cmpi eq, %73, %74 : vector<98x95xi32>
    %cst_16 = arith.constant 0.000000e+00 : f32
    %76 = vector.broadcast %cst_16 : f32 to vector<98x95xf32>
    %77 = arith.select %75, %0, %76 : vector<98x95xi1>, vector<98x95xf32>
    %cst_17 = arith.constant dense<0.000000e+00> : vector<98xf32>
    %78 = vector.multi_reduction <add>, %77, %cst_17 [1] : vector<98x95xf32> to vector<98xf32>
    %79 = vector.shape_cast %78 : vector<98xf32> to vector<98x1xf32>
    %80 = arith.subf %56, %79 : vector<98x1xf32>
    %cst_18 = arith.constant dense<0.000000e+00> : vector<1xf32>
    %81 = vector.multi_reduction <add>, %38, %cst_18 [0] : vector<98x1xf32> to vector<1xf32>
    %82 = vector.shape_cast %81 : vector<1xf32> to vector<1x1xf32>
    %cst_19 = arith.constant 0.000000e+00 : f32
    %83 = vector.broadcast %cst_19 : f32 to vector<98x1xf32>
    %84 = arith.select %5, %80, %83 : vector<98x1xi1>, vector<98x1xf32>
    %cst_20 = arith.constant dense<0.000000e+00> : vector<1xf32>
    %85 = vector.multi_reduction <add>, %84, %cst_20 [0] : vector<98x1xf32> to vector<1xf32>
    %86 = vector.shape_cast %85 : vector<1xf32> to vector<1x1xf32>
    %cst_21 = arith.constant dense<0.000000e+00> : vector<1xf32>
    %87 = vector.multi_reduction <add>, %9, %cst_21 [0] : vector<98x1xf32> to vector<1xf32>
    %88 = vector.shape_cast %87 : vector<1xf32> to vector<1x1xf32>
    %89 = tpu.iota {dimensions = array<i32: 1>} : vector<1x128xi32>
    %c0_i32 = arith.constant 0 : i32
    %90 = vector.broadcast %c0_i32 : i32 to vector<1x128xi32>
    %91 = arith.cmpi eq, %89, %90 : vector<1x128xi32>
    %cst_22 = arith.constant 0.000000e+00 : f32
    %92 = vector.shape_cast %82 : vector<1x1xf32> to vector<1x1xf32>
    %93 = vector.broadcast %92 : vector<1x1xf32> to vector<1x128xf32>
    %94 = vector.broadcast %cst_22 : f32 to vector<1x128xf32>
    %95 = arith.select %91, %93, %94 : vector<1x128xi1>, vector<1x128xf32>
    %c1_i32 = arith.constant 1 : i32
    %96 = vector.broadcast %c1_i32 : i32 to vector<1x128xi32>
    %97 = arith.cmpi eq, %89, %96 : vector<1x128xi32>
    %cst_23 = arith.constant 0.000000e+00 : f32
    %98 = vector.shape_cast %86 : vector<1x1xf32> to vector<1x1xf32>
    %99 = vector.broadcast %98 : vector<1x1xf32> to vector<1x128xf32>
    %100 = vector.broadcast %cst_23 : f32 to vector<1x128xf32>
    %101 = arith.select %97, %99, %100 : vector<1x128xi1>, vector<1x128xf32>
    %102 = arith.addf %95, %101 : vector<1x128xf32>
    %c2_i32 = arith.constant 2 : i32
    %103 = vector.broadcast %c2_i32 : i32 to vector<1x128xi32>
    %104 = arith.cmpi eq, %89, %103 : vector<1x128xi32>
    %cst_24 = arith.constant 0.000000e+00 : f32
    %105 = vector.shape_cast %88 : vector<1x1xf32> to vector<1x1xf32>
    %106 = vector.broadcast %105 : vector<1x1xf32> to vector<1x128xf32>
    %107 = vector.broadcast %cst_24 : f32 to vector<1x128xf32>
    %108 = arith.select %104, %106, %107 : vector<1x128xi1>, vector<1x128xf32>
    %109 = arith.addf %102, %108 : vector<1x128xf32>
    %c0_25 = arith.constant 0 : index
    %c0_26 = arith.constant 0 : index
    %110 = vector.load %arg3[%c0_25, %c0_26] : memref<1x128xf32, #tpu.memory_space<vmem>>, vector<1x128xf32>
    tpu.vector_store %arg3[%c0_25, %c0_26], %109 {strides = array<i32>} : memref<1x128xf32, #tpu.memory_space<vmem>>, vector<1x128xf32>,
    return
  }
  func.func @transform_0(%arg0: i32) -> (i32, i32) {
    %c0_i32 = arith.constant 0 : i32
    %c0_i32_0 = arith.constant 0 : i32
    return %arg0, %c0_i32 : i32, i32
  }
  func.func @transform_1(%arg0: i32) -> (i32, i32) {
    %c0_i32 = arith.constant 0 : i32
    %c0_i32_0 = arith.constant 0 : i32
    return %arg0, %c0_i32 : i32, i32
  }
  func.func @transform_2(%arg0: i32) -> (i32, i32) {
    %c0_i32 = arith.constant 0 : i32
    %c0_i32_0 = arith.constant 0 : i32
    return %arg0, %c0_i32 : i32, i32
  }
}

</mosaic_0001>

<llo_original>
// kernel: tpu_custom_call.1
$region0: #{tpu_custom_call.1}
  #allocation0 [shape = 'u32[]', space=smem, size = 0x4, offset = 0x4, fixed_abs, tag = 'smem constant byte address 0x4 - core index']
  #allocation1 [shape = 'u32[144,128]{1,0:T(1,128)}', space=vmem, size = 0x12000, scoped, tag = 'internal scratch']
  %s0 = inlined_call_operand.vmem [shape: f32[98,95], index: 0, kind: input, shape index: {}]
  %s1 = inlined_call_operand.vmem [shape: f32[98,95], index: 1, kind: input, shape index: {}]
  %s2 = inlined_call_operand.hbm [shape: f32[1,128], index: 2, kind: output, shape index: {}]
  %s3 = sld [smem:[#allocation0]]
  $region18: #{tpu_custom_call.1} parent=0
    _
  %s5 = ssub.s32 1, %s3
  %s6 = scalar_select 0, %s5, %s3
  $region1: #{tpu_custom_call.1} parent=0
    #allocation2 [shape = 'u8[512]{0}', space=vmem, size = 0x400, scoped, tag = 'output window, operand 0, single buffered']
    #allocation3 [shape = 's32[1]{0}', space=sflag, size = 0x4, scoped, tag = 'scoped memory for tpu_custom_call.1']
    %7 = vsyncpa [#allocation3], 0
    // Predicated region
    $region2: #{tpu_custom_call.1} parent=1 // pred_check
      _
    $region3: #{tpu_custom_call.1} parent=1 // pred_check_branch
      %9 = sbr.rel (0) target = $region5
    $region4: #{tpu_custom_call.1} parent=1 // pred_region
      _
    $region5: #{tpu_custom_call.1} parent=1 // pred_fallthru
      _
    // Predicated region
    $region6: #{tpu_custom_call.1} parent=1 // pred_check
      _
    $region7: #{tpu_custom_call.1} parent=1 // pred_check_branch
      %11 = sbr.rel (0) target = $region9
    $region8: #{tpu_custom_call.1} parent=1 // pred_region
      _
    $region9: #{tpu_custom_call.1} parent=1 // pred_fallthru
      _
    %v12 = vld [vmem:[%s0] sm:$0xff]
    %v13 = vld [vmem:[%s0 + $0x8] sm:$0xff]
    %v14 = vld [vmem:[%s0 + $0x10] sm:$0xff]
    %v15 = vld [vmem:[%s0 + $0x18] sm:$0xff]
    %v16 = vld [vmem:[%s0 + $0x20] sm:$0xff]
    %v17 = vld [vmem:[%s0 + $0x28] sm:$0xff]
    %v18 = vld [vmem:[%s0 + $0x30] sm:$0xff]
    %v19 = vld [vmem:[%s0 + $0x38] sm:$0xff]
    %v20 = vld [vmem:[%s0 + $0x40] sm:$0xff]
    %v21 = vld [vmem:[%s0 + $0x48] sm:$0xff]
    %v22 = vld [vmem:[%s0 + $0x50] sm:$0xff]
    %v23 = vld [vmem:[%s0 + $0x58] sm:$0xff]
    %v24 = vld [vmem:[%s0 + $0x60] sm:$0x3]
    %v25 = vld [vmem:[%s1] sm:$0xff]
    %v26 = vld [vmem:[%s1 + $0x8] sm:$0xff]
    %v27 = vld [vmem:[%s1 + $0x10] sm:$0xff]
    %v28 = vld [vmem:[%s1 + $0x18] sm:$0xff]
    %v29 = vld [vmem:[%s1 + $0x20] sm:$0xff]
    %v30 = vld [vmem:[%s1 + $0x28] sm:$0xff]
    %v31 = vld [vmem:[%s1 + $0x30] sm:$0xff]
    %v32 = vld [vmem:[%s1 + $0x38] sm:$0xff]
    %v33 = vld [vmem:[%s1 + $0x40] sm:$0xff]
    %v34 = vld [vmem:[%s1 + $0x48] sm:$0xff]
    %v35 = vld [vmem:[%s1 + $0x50] sm:$0xff]
    %v36 = vld [vmem:[%s1 + $0x58] sm:$0xff]
    %v37 = vld [vmem:[%s1 + $0x60] sm:$0x3]
    %v38 = vlaneseq
    %v39 = vand.u32 %v38, 127
    %vm40 = vcmp.gt.f32.partialorder %v25, 0.0
    %vm41 = vcmp.gt.f32.partialorder %v26, 0.0
    %vm42 = vcmp.gt.f32.partialorder %v27, 0.0
    %vm43 = vcmp.gt.f32.partialorder %v28, 0.0
    %vm44 = vcmp.gt.f32.partialorder %v29, 0.0
    %vm45 = vcmp.gt.f32.partialorder %v30, 0.0
    %vm46 = vcmp.gt.f32.partialorder %v31, 0.0
    %vm47 = vcmp.gt.f32.partialorder %v32, 0.0
    %vm48 = vcmp.gt.f32.partialorder %v33, 0.0
    %vm49 = vcmp.gt.f32.partialorder %v34, 0.0
    %vm50 = vcmp.gt.f32.partialorder %v35, 0.0
    %vm51 = vcmp.gt.f32.partialorder %v36, 0.0
    %vm52 = vcmp.gt.f32.partialorder %v37, 0.0
    %vm53 = vcmp.eq.f32.partialorder %v25, 0.0
    %vm54 = vcmp.eq.f32.partialorder %v26, 0.0
    %vm55 = vcmp.eq.f32.partialorder %v27, 0.0
    %vm56 = vcmp.eq.f32.partialorder %v28, 0.0
    %vm57 = vcmp.eq.f32.partialorder %v29, 0.0
    %vm58 = vcmp.eq.f32.partialorder %v30, 0.0
    %vm59 = vcmp.eq.f32.partialorder %v31, 0.0
    %vm60 = vcmp.eq.f32.partialorder %v32, 0.0
    %vm61 = vcmp.eq.f32.partialorder %v33, 0.0
    %vm62 = vcmp.eq.f32.partialorder %v34, 0.0
    %vm63 = vcmp.eq.f32.partialorder %v35, 0.0
    %vm64 = vcmp.eq.f32.partialorder %v36, 0.0
    %vm65 = vcmp.eq.f32.partialorder %v37, 0.0
    %v66 = vsel %vm40, 1, 0
    %v67 = vsel %vm41, 1, 0
    %v68 = vsel %vm42, 1, 0
    %v69 = vsel %vm43, 1, 0
    %v70 = vsel %vm44, 1, 0
    %v71 = vsel %vm45, 1, 0
    %v72 = vsel %vm46, 1, 0
    %v73 = vsel %vm47, 1, 0
    %v74 = vsel %vm48, 1, 0
    %v75 = vsel %vm49, 1, 0
    %v76 = vsel %vm50, 1, 0
    %v77 = vsel %vm51, 1, 0
    %v78 = vsel %vm52, 1, 0
    %v79 = vcvt.s32.f32 %v66
    %v80 = vcvt.s32.f32 %v67
    %v81 = vcvt.s32.f32 %v68
    %v82 = vcvt.s32.f32 %v69
    %v83 = vcvt.s32.f32 %v70
    %v84 = vcvt.s32.f32 %v71
    %v85 = vcvt.s32.f32 %v72
    %v86 = vcvt.s32.f32 %v73
    %v87 = vcvt.s32.f32 %v74
    %v88 = vcvt.s32.f32 %v75
    %v89 = vcvt.s32.f32 %v76
    %v90 = vcvt.s32.f32 %v77
    %v91 = vcvt.s32.f32 %v78
    %v92 = vsel %vm53, 1, 0
    %v93 = vsel %vm54, 1, 0
    %v94 = vsel %vm55, 1, 0
    %v95 = vsel %vm56, 1, 0
    %v96 = vsel %vm57, 1, 0
    %v97 = vsel %vm58, 1, 0
    %v98 = vsel %vm59, 1, 0
    %v99 = vsel %vm60, 1, 0
    %v100 = vsel %vm61, 1, 0
    %v101 = vsel %vm62, 1, 0
    %v102 = vsel %vm63, 1, 0
    %v103 = vsel %vm64, 1, 0
    %v104 = vsel %vm65, 1, 0
    %v105 = vcvt.s32.f32 %v92
    %v106 = vcvt.s32.f32 %v93
    %v107 = vcvt.s32.f32 %v94
    %v108 = vcvt.s32.f32 %v95
    %v109 = vcvt.s32.f32 %v96
    %v110 = vcvt.s32.f32 %v97
    %v111 = vcvt.s32.f32 %v98
    %v112 = vcvt.s32.f32 %v99
    %v113 = vcvt.s32.f32 %v100
    %v114 = vcvt.s32.f32 %v101
    %v115 = vcvt.s32.f32 %v102
    %v116 = vcvt.s32.f32 %v103
    %v117 = vcvt.s32.f32 %v104
    %v118 = vsub.f32 %v12, %v25
    %v119 = vsub.f32 %v13, %v26
    %v120 = vsub.f32 %v14, %v27
    %v121 = vsub.f32 %v15, %v28
    %v122 = vsub.f32 %v16, %v29
    %v123 = vsub.f32 %v17, %v30
    %v124 = vsub.f32 %v18, %v31
    %v125 = vsub.f32 %v19, %v32
    %v126 = vsub.f32 %v20, %v33
    %v127 = vsub.f32 %v21, %v34
    %v128 = vsub.f32 %v22, %v35
    %v129 = vsub.f32 %v23, %v36
    %v130 = vsub.f32 %v24, %v37
    %v131 = vmul.f32 %v118, %v118
    %v132 = vmul.f32 %v119, %v119
    %v133 = vmul.f32 %v120, %v120
    %v134 = vmul.f32 %v121, %v121
    %v135 = vmul.f32 %v122, %v122
    %v136 = vmul.f32 %v123, %v123
    %v137 = vmul.f32 %v124, %v124
    %v138 = vmul.f32 %v125, %v125
    %v139 = vmul.f32 %v126, %v126
    %v140 = vmul.f32 %v127, %v127
    %v141 = vmul.f32 %v128, %v128
    %v142 = vmul.f32 %v129, %v129
    %v143 = vmul.f32 %v130, %v130
    %vm144 = vcmp.lt.s32.totalorder %v39, 4
    %v145 = vmul.f32 %v79, 5.0
    %v146 = vmul.f32 %v80, 5.0
    %v147 = vmul.f32 %v81, 5.0
    %v148 = vmul.f32 %v82, 5.0
    %v149 = vmul.f32 %v83, 5.0
    %v150 = vmul.f32 %v84, 5.0
    %v151 = vmul.f32 %v85, 5.0
    %v152 = vmul.f32 %v86, 5.0
    %v153 = vmul.f32 %v87, 5.0
    %v154 = vmul.f32 %v88, 5.0
    %v155 = vmul.f32 %v89, 5.0
    %v156 = vmul.f32 %v90, 5.0
    %v157 = vmul.f32 %v91, 5.0
    %v158 = vsel %vm144, 1, 0
    %vm159 = vcmp.eq.s32.totalorder %v158, 1
    %161 = vset.pattern.permute.xlu0 4
    %162 = vperm.xlu0 %161, %v145
    %v163 = vpop.permute.xlu0 %162
    %166 = vset.pattern.permute.xlu0 4
    %167 = vperm.xlu0 %166, %v146
    %v168 = vpop.permute.xlu0 %167
    %171 = vset.pattern.permute.xlu0 4
    %172 = vperm.xlu0 %171, %v147
    %v173 = vpop.permute.xlu0 %172
    %176 = vset.pattern.permute.xlu0 4
    %177 = vperm.xlu0 %176, %v148
    %v178 = vpop.permute.xlu0 %177
    %181 = vset.pattern.permute.xlu0 4
    %182 = vperm.xlu0 %181, %v149
    %v183 = vpop.permute.xlu0 %182
    %186 = vset.pattern.permute.xlu0 4
    %187 = vperm.xlu0 %186, %v150
    %v188 = vpop.permute.xlu0 %187
    %191 = vset.pattern.permute.xlu0 4
    %192 = vperm.xlu0 %191, %v151
    %v193 = vpop.permute.xlu0 %192
    %196 = vset.pattern.permute.xlu0 4
    %197 = vperm.xlu0 %196, %v152
    %v198 = vpop.permute.xlu0 %197
    %201 = vset.pattern.permute.xlu0 4
    %202 = vperm.xlu0 %201, %v153
    %v203 = vpop.permute.xlu0 %202
    %206 = vset.pattern.permute.xlu0 4
    %207 = vperm.xlu0 %206, %v154
    %v208 = vpop.permute.xlu0 %207
    %211 = vset.pattern.permute.xlu0 4
    %212 = vperm.xlu0 %211, %v155
    %v213 = vpop.permute.xlu0 %212
    %216 = vset.pattern.permute.xlu0 4
    %217 = vperm.xlu0 %216, %v156
    %v218 = vpop.permute.xlu0 %217
    %221 = vset.pattern.permute.xlu0 4
    %222 = vperm.xlu0 %221, %v157
    %v223 = vpop.permute.xlu0 %222
    %v225 = vsel %vm159, %v163, 0.0
    %v226 = vsel %vm159, %v168, 0.0
    %v227 = vsel %vm159, %v173, 0.0
    %v228 = vsel %vm159, %v178, 0.0
    %v229 = vsel %vm159, %v183, 0.0
    %v230 = vsel %vm159, %v188, 0.0
    %v231 = vsel %vm159, %v193, 0.0
    %v232 = vsel %vm159, %v198, 0.0
    %v233 = vsel %vm159, %v203, 0.0
    %v234 = vsel %vm159, %v208, 0.0
    %v235 = vsel %vm159, %v213, 0.0
    %v236 = vsel %vm159, %v218, 0.0
    %v237 = vsel %vm159, %v223, 0.0
    %vm238 = vcmp.eq.s32.totalorder %v39, 4
    %v239 = vmul.f32 %v105, 0.5
    %v240 = vmul.f32 %v106, 0.5
    %v241 = vmul.f32 %v107, 0.5
    %v242 = vmul.f32 %v108, 0.5
    %v243 = vmul.f32 %v109, 0.5
    %v244 = vmul.f32 %v110, 0.5
    %v245 = vmul.f32 %v111, 0.5
    %v246 = vmul.f32 %v112, 0.5
    %v247 = vmul.f32 %v113, 0.5
    %v248 = vmul.f32 %v114, 0.5
    %v249 = vmul.f32 %v115, 0.5
    %v250 = vmul.f32 %v116, 0.5
    %v251 = vmul.f32 %v117, 0.5
    %v252 = vadd.f32 %v79, %v239
    %v253 = vadd.f32 %v80, %v240
    %v254 = vadd.f32 %v81, %v241
    %v255 = vadd.f32 %v82, %v242
    %v256 = vadd.f32 %v83, %v243
    %v257 = vadd.f32 %v84, %v244
    %v258 = vadd.f32 %v85, %v245
    %v259 = vadd.f32 %v86, %v246
    %v260 = vadd.f32 %v87, %v247
    %v261 = vadd.f32 %v88, %v248
    %v262 = vadd.f32 %v89, %v249
    %v263 = vadd.f32 %v90, %v250
    %v264 = vadd.f32 %v91, %v251
    %v265 = vsel %vm238, 1, 0
    %vm266 = vcmp.eq.s32.totalorder %v265, 1
    %268 = vset.pattern.permute.xlu0 4
    %269 = vperm.xlu0 %268, %v252
    %v270 = vpop.permute.xlu0 %269
    %273 = vset.pattern.permute.xlu0 4
    %274 = vperm.xlu0 %273, %v253
    %v275 = vpop.permute.xlu0 %274
    %278 = vset.pattern.permute.xlu0 4
    %279 = vperm.xlu0 %278, %v254
    %v280 = vpop.permute.xlu0 %279
    %283 = vset.pattern.permute.xlu0 4
    %284 = vperm.xlu0 %283, %v255
    %v285 = vpop.permute.xlu0 %284
    %288 = vset.pattern.permute.xlu0 4
    %289 = vperm.xlu0 %288, %v256
    %v290 = vpop.permute.xlu0 %289
    %293 = vset.pattern.permute.xlu0 4
    %294 = vperm.xlu0 %293, %v257
    %v295 = vpop.permute.xlu0 %294
    %298 = vset.pattern.permute.xlu0 4
    %299 = vperm.xlu0 %298, %v258
    %v300 = vpop.permute.xlu0 %299
    %303 = vset.pattern.permute.xlu0 4
    %304 = vperm.xlu0 %303, %v259
    %v305 = vpop.permute.xlu0 %304
    %308 = vset.pattern.permute.xlu0 4
    %309 = vperm.xlu0 %308, %v260
    %v310 = vpop.permute.xlu0 %309
    %313 = vset.pattern.permute.xlu0 4
    %314 = vperm.xlu0 %313, %v261
    %v315 = vpop.permute.xlu0 %314
    %318 = vset.pattern.permute.xlu0 4
    %319 = vperm.xlu0 %318, %v262
    %v320 = vpop.permute.xlu0 %319
    %323 = vset.pattern.permute.xlu0 4
    %324 = vperm.xlu0 %323, %v263
    %v325 = vpop.permute.xlu0 %324
    %328 = vset.pattern.permute.xlu0 4
    %329 = vperm.xlu0 %328, %v264
    %v330 = vpop.permute.xlu0 %329
    %v332 = vsel %vm266, %v270, 0.0
    %v333 = vsel %vm266, %v275, 0.0
    %v334 = vsel %vm266, %v280, 0.0
    %v335 = vsel %vm266, %v285, 0.0
    %v336 = vsel %vm266, %v290, 0.0
    %v337 = vsel %vm266, %v295, 0.0
    %v338 = vsel %vm266, %v300, 0.0
    %v339 = vsel %vm266, %v305, 0.0
    %v340 = vsel %vm266, %v310, 0.0
    %v341 = vsel %vm266, %v315, 0.0
    %v342 = vsel %vm266, %v320, 0.0
    %v343 = vsel %vm266, %v325, 0.0
    %v344 = vsel %vm266, %v330, 0.0
    %v345 = vadd.f32 %v225, %v332
    %v346 = vadd.f32 %v226, %v333
    %v347 = vadd.f32 %v227, %v334
    %v348 = vadd.f32 %v228, %v335
    %v349 = vadd.f32 %v229, %v336
    %v350 = vadd.f32 %v230, %v337
    %v351 = vadd.f32 %v231, %v338
    %v352 = vadd.f32 %v232, %v339
    %v353 = vadd.f32 %v233, %v340
    %v354 = vadd.f32 %v234, %v341
    %v355 = vadd.f32 %v235, %v342
    %v356 = vadd.f32 %v236, %v343
    %v357 = vadd.f32 %v237, %v344
    %v358 = vmul.f32 %v345, %v131
    %v359 = vmul.f32 %v346, %v132
    %v360 = vmul.f32 %v347, %v133
    %v361 = vmul.f32 %v348, %v134
    %v362 = vmul.f32 %v349, %v135
    %v363 = vmul.f32 %v350, %v136
    %v364 = vmul.f32 %v351, %v137
    %v365 = vmul.f32 %v352, %v138
    %v366 = vmul.f32 %v353, %v139
    %v367 = vmul.f32 %v354, %v140
    %v368 = vmul.f32 %v355, %v141
    %v369 = vmul.f32 %v356, %v142
    %v370 = vmul.f32 %v357, %v143
    %vm371 = vcmask 777216
    %v372 = vsel %vm371, %v358, 0.0
    %373 = vadd.xlane.f32.xlu0 %v372
    %v374 = vpop.xlane.xlu0 %373
    %v375 = vsel %vm371, %v359, 0.0
    %376 = vadd.xlane.f32.xlu0 %v375
    %v377 = vpop.xlane.xlu0 %376
    %v378 = vsel %vm371, %v360, 0.0
    %379 = vadd.xlane.f32.xlu0 %v378
    %v380 = vpop.xlane.xlu0 %379
    %v381 = vsel %vm371, %v361, 0.0
    %382 = vadd.xlane.f32.xlu0 %v381
    %v383 = vpop.xlane.xlu0 %382
    %v384 = vsel %vm371, %v362, 0.0
    %385 = vadd.xlane.f32.xlu0 %v384
    %v386 = vpop.xlane.xlu0 %385
    %v387 = vsel %vm371, %v363, 0.0
    %388 = vadd.xlane.f32.xlu0 %v387
    %v389 = vpop.xlane.xlu0 %388
    %v390 = vsel %vm371, %v364, 0.0
    %391 = vadd.xlane.f32.xlu0 %v390
    %v392 = vpop.xlane.xlu0 %391
    %v393 = vsel %vm371, %v365, 0.0
    %394 = vadd.xlane.f32.xlu0 %v393
    %v395 = vpop.xlane.xlu0 %394
    %v396 = vsel %vm371, %v366, 0.0
    %397 = vadd.xlane.f32.xlu0 %v396
    %v398 = vpop.xlane.xlu0 %397
    %v399 = vsel %vm371, %v367, 0.0
    %400 = vadd.xlane.f32.xlu0 %v399
    %v401 = vpop.xlane.xlu0 %400
    %v402 = vsel %vm371, %v368, 0.0
    %403 = vadd.xlane.f32.xlu0 %v402
    %v404 = vpop.xlane.xlu0 %403
    %v405 = vsel %vm371, %v369, 0.0
    %406 = vadd.xlane.f32.xlu0 %v405
    %v407 = vpop.xlane.xlu0 %406
    %vm408 = vcmask 771072
    %v409 = vsel %vm408, %v370, 0.0
    %410 = vadd.xlane.f32.xlu0 %v409
    %v411 = vpop.xlane.xlu0 %410
    %vm412 = vcmp.ge.s32.totalorder %v39, 5
    %vm413 = vcmp.lt.s32.totalorder %v39, 95
    %vm414 = vmand %vm412, %vm413
    %v415 = vsel %vm414, 1, 0
    %vm416 = vcmp.eq.s32.totalorder %v415, 1
    %v417 = vsel %vm416, %v12, -1e+30
    %v418 = vsel %vm416, %v13, -1e+30
    %v419 = vsel %vm416, %v14, -1e+30
    %v420 = vsel %vm416, %v15, -1e+30
    %v421 = vsel %vm416, %v16, -1e+30
    %v422 = vsel %vm416, %v17, -1e+30
    %v423 = vsel %vm416, %v18, -1e+30
    %v424 = vsel %vm416, %v19, -1e+30
    %v425 = vsel %vm416, %v20, -1e+30
    %v426 = vsel %vm416, %v21, -1e+30
    %v427 = vsel %vm416, %v22, -1e+30
    %v428 = vsel %vm416, %v23, -1e+30
    %v429 = vsel %vm416, %v24, -1e+30
    %v430 = vsel %vm371, %v417, -inf
    %431 = vmax.xlane.f32.xlu0 %v430
    %v432 = vpop.xlane.xlu0 %431
    %v433 = vsel %vm371, %v418, -inf
    %434 = vmax.xlane.f32.xlu0 %v433
    %v435 = vpop.xlane.xlu0 %434
    %v436 = vsel %vm371, %v419, -inf
    %437 = vmax.xlane.f32.xlu0 %v436
    %v438 = vpop.xlane.xlu0 %437
    %v439 = vsel %vm371, %v420, -inf
    %440 = vmax.xlane.f32.xlu0 %v439
    %v441 = vpop.xlane.xlu0 %440
    %v442 = vsel %vm371, %v421, -inf
    %443 = vmax.xlane.f32.xlu0 %v442
    %v444 = vpop.xlane.xlu0 %443
    %v445 = vsel %vm371, %v422, -inf
    %446 = vmax.xlane.f32.xlu0 %v445
    %v447 = vpop.xlane.xlu0 %446
    %v448 = vsel %vm371, %v423, -inf
    %449 = vmax.xlane.f32.xlu0 %v448
    %v450 = vpop.xlane.xlu0 %449
    %v451 = vsel %vm371, %v424, -inf
    %452 = vmax.xlane.f32.xlu0 %v451
    %v453 = vpop.xlane.xlu0 %452
    %v454 = vsel %vm371, %v425, -inf
    %455 = vmax.xlane.f32.xlu0 %v454
    %v456 = vpop.xlane.xlu0 %455
    %v457 = vsel %vm371, %v426, -inf
    %458 = vmax.xlane.f32.xlu0 %v457
    %v459 = vpop.xlane.xlu0 %458
    %v460 = vsel %vm371, %v427, -inf
    %461 = vmax.xlane.f32.xlu0 %v460
    %v462 = vpop.xlane.xlu0 %461
    %v463 = vsel %vm371, %v428, -inf
    %464 = vmax.xlane.f32.xlu0 %v463
    %v465 = vpop.xlane.xlu0 %464
    %v466 = vsel %vm408, %v429, -inf
    %467 = vmax.xlane.f32.xlu0 %v466
    %v468 = vpop.xlane.xlu0 %467
    %v469 = vsub.f32 %v417, %v432
    %v470 = vsub.f32 %v418, %v435
    %v471 = vsub.f32 %v419, %v438
    %v472 = vsub.f32 %v420, %v441
    %v473 = vsub.f32 %v421, %v444
    %v474 = vsub.f32 %v422, %v447
    %v475 = vsub.f32 %v423, %v450
    %v476 = vsub.f32 %v424, %v453
    %v477 = vsub.f32 %v425, %v456
    %v478 = vsub.f32 %v426, %v459
    %v479 = vsub.f32 %v427, %v462
    %v480 = vsub.f32 %v428, %v465
    %v481 = vsub.f32 %v429, %v468
    %v482 = vmul.f32 %v469, 1.442695
    %v483 = vpow.pop %v482
    %v484 = vmul.f32 %v470, 1.442695
    %v485 = vpow.pop %v484
    %v486 = vmul.f32 %v471, 1.442695
    %v487 = vpow.pop %v486
    %v488 = vmul.f32 %v472, 1.442695
    %v489 = vpow.pop %v488
    %v490 = vmul.f32 %v473, 1.442695
    %v491 = vpow.pop %v490
    %v492 = vmul.f32 %v474, 1.442695
    %v493 = vpow.pop %v492
    %v494 = vmul.f32 %v475, 1.442695
    %v495 = vpow.pop %v494
    %v496 = vmul.f32 %v476, 1.442695
    %v497 = vpow.pop %v496
    %v498 = vmul.f32 %v477, 1.442695
    %v499 = vpow.pop %v498
    %v500 = vmul.f32 %v478, 1.442695
    %v501 = vpow.pop %v500
    %v502 = vmul.f32 %v479, 1.442695
    %v503 = vpow.pop %v502
    %v504 = vmul.f32 %v480, 1.442695
    %v505 = vpow.pop %v504
    %v506 = vmul.f32 %v481, 1.442695
    %v507 = vpow.pop %v506
    %v508 = vsel %vm371, %v483, 0.0
    %509 = vadd.xlane.f32.xlu0 %v508
    %v510 = vpop.xlane.xlu0 %509
    %v511 = vsel %vm371, %v485, 0.0
    %512 = vadd.xlane.f32.xlu0 %v511
    %v513 = vpop.xlane.xlu0 %512
    %v514 = vsel %vm371, %v487, 0.0
    %515 = vadd.xlane.f32.xlu0 %v514
    %v516 = vpop.xlane.xlu0 %515
    %v517 = vsel %vm371, %v489, 0.0
    %518 = vadd.xlane.f32.xlu0 %v517
    %v519 = vpop.xlane.xlu0 %518
    %v520 = vsel %vm371, %v491, 0.0
    %521 = vadd.xlane.f32.xlu0 %v520
    %v522 = vpop.xlane.xlu0 %521
    %v523 = vsel %vm371, %v493, 0.0
    %524 = vadd.xlane.f32.xlu0 %v523
    %v525 = vpop.xlane.xlu0 %524
    %v526 = vsel %vm371, %v495, 0.0
    %527 = vadd.xlane.f32.xlu0 %v526
    %v528 = vpop.xlane.xlu0 %527
    %v529 = vsel %vm371, %v497, 0.0
    %530 = vadd.xlane.f32.xlu0 %v529
    %v531 = vpop.xlane.xlu0 %530
    %v532 = vsel %vm371, %v499, 0.0
    %533 = vadd.xlane.f32.xlu0 %v532
    %v534 = vpop.xlane.xlu0 %533
    %v535 = vsel %vm371, %v501, 0.0
    %536 = vadd.xlane.f32.xlu0 %v535
    %v537 = vpop.xlane.xlu0 %536
    %v538 = vsel %vm371, %v503, 0.0
    %539 = vadd.xlane.f32.xlu0 %v538
    %v540 = vpop.xlane.xlu0 %539
    %v541 = vsel %vm371, %v505, 0.0
    %542 = vadd.xlane.f32.xlu0 %v541
    %v543 = vpop.xlane.xlu0 %542
    %v544 = vsel %vm408, %v507, 0.0
    %545 = vadd.xlane.f32.xlu0 %v544
    %v546 = vpop.xlane.xlu0 %545
    %v547 = vlog2.pop %v510
    %v548 = vmul.f32 %v547, 0.6931472
    %v549 = vlog2.pop %v513
    %v550 = vmul.f32 %v549, 0.6931472
    %v551 = vlog2.pop %v516
    %v552 = vmul.f32 %v551, 0.6931472
    %v553 = vlog2.pop %v519
    %v554 = vmul.f32 %v553, 0.6931472
    %v555 = vlog2.pop %v522
    %v556 = vmul.f32 %v555, 0.6931472
    %v557 = vlog2.pop %v525
    %v558 = vmul.f32 %v557, 0.6931472
    %v559 = vlog2.pop %v528
    %v560 = vmul.f32 %v559, 0.6931472
    %v561 = vlog2.pop %v531
    %v562 = vmul.f32 %v561, 0.6931472
    %v563 = vlog2.pop %v534
    %v564 = vmul.f32 %v563, 0.6931472
    %v565 = vlog2.pop %v537
    %v566 = vmul.f32 %v565, 0.6931472
    %v567 = vlog2.pop %v540
    %v568 = vmul.f32 %v567, 0.6931472
    %v569 = vlog2.pop %v543
    %v570 = vmul.f32 %v569, 0.6931472
    %v571 = vlog2.pop %v546
    %v572 = vmul.f32 %v571, 0.6931472
    %v573 = vadd.f32 %v432, %v548
    %v574 = vadd.f32 %v435, %v550
    %v575 = vadd.f32 %v438, %v552
    %v576 = vadd.f32 %v441, %v554
    %v577 = vadd.f32 %v444, %v556
    %v578 = vadd.f32 %v447, %v558
    %v579 = vadd.f32 %v450, %v560
    %v580 = vadd.f32 %v453, %v562
    %v581 = vadd.f32 %v456, %v564
    %v582 = vadd.f32 %v459, %v566
    %v583 = vadd.f32 %v462, %v568
    %v584 = vadd.f32 %v465, %v570
    %v585 = vadd.f32 %v468, %v572
    %v586 = vsel %vm416, %v25, -1e+30
    %v587 = vsel %vm416, %v26, -1e+30
    %v588 = vsel %vm416, %v27, -1e+30
    %v589 = vsel %vm416, %v28, -1e+30
    %v590 = vsel %vm416, %v29, -1e+30
    %v591 = vsel %vm416, %v30, -1e+30
    %v592 = vsel %vm416, %v31, -1e+30
    %v593 = vsel %vm416, %v32, -1e+30
    %v594 = vsel %vm416, %v33, -1e+30
    %v595 = vsel %vm416, %v34, -1e+30
    %v596 = vsel %vm416, %v35, -1e+30
    %v597 = vsel %vm416, %v36, -1e+30
    %v598 = vsel %vm416, %v37, -1e+30
    %v599 = vsel %vm371, %v586, -inf
    %600 = vmax.xlane.f32.xlu0 %v599
    %v601 = vpop.xlane.xlu0 %600
    %v602 = vsel %vm371, %v587, -inf
    %603 = vmax.xlane.f32.xlu0 %v602
    %v604 = vpop.xlane.xlu0 %603
    %v605 = vsel %vm371, %v588, -inf
    %606 = vmax.xlane.f32.xlu0 %v605
    %v607 = vpop.xlane.xlu0 %606
    %v608 = vsel %vm371, %v589, -inf
    %609 = vmax.xlane.f32.xlu0 %v608
    %v610 = vpop.xlane.xlu0 %609
    %v611 = vsel %vm371, %v590, -inf
    %612 = vmax.xlane.f32.xlu0 %v611
    %v613 = vpop.xlane.xlu0 %612
    %v614 = vsel %vm371, %v591, -inf
    %615 = vmax.xlane.f32.xlu0 %v614
    %v616 = vpop.xlane.xlu0 %615
    %v617 = vsel %vm371, %v592, -inf
    %618 = vmax.xlane.f32.xlu0 %v617
    %v619 = vpop.xlane.xlu0 %618
    %v620 = vsel %vm371, %v593, -inf
    %621 = vmax.xlane.f32.xlu0 %v620
    %v622 = vpop.xlane.xlu0 %621
    %v623 = vsel %vm371, %v594, -inf
    %624 = vmax.xlane.f32.xlu0 %v623
    %v625 = vpop.xlane.xlu0 %624
    %v626 = vsel %vm371, %v595, -inf
    %627 = vmax.xlane.f32.xlu0 %v626
    %v628 = vpop.xlane.xlu0 %627
    %v629 = vsel %vm371, %v596, -inf
    %630 = vmax.xlane.f32.xlu0 %v629
    %v631 = vpop.xlane.xlu0 %630
    %v632 = vsel %vm371, %v597, -inf
    %633 = vmax.xlane.f32.xlu0 %v632
    %v634 = vpop.xlane.xlu0 %633
    %v635 = vsel %vm408, %v598, -inf
    %636 = vmax.xlane.f32.xlu0 %v635
    %v637 = vpop.xlane.xlu0 %636
    %vm638 = vcmp.eq.f32.partialorder %v586, %v601
    %vm639 = vcmp.eq.f32.partialorder %v587, %v604
    %vm640 = vcmp.eq.f32.partialorder %v588, %v607
    %vm641 = vcmp.eq.f32.partialorder %v589, %v610
    %vm642 = vcmp.eq.f32.partialorder %v590, %v613
    %vm643 = vcmp.eq.f32.partialorder %v591, %v616
    %vm644 = vcmp.eq.f32.partialorder %v592, %v619
    %vm645 = vcmp.eq.f32.partialorder %v593, %v622
    %vm646 = vcmp.eq.f32.partialorder %v594, %v625
    %vm647 = vcmp.eq.f32.partialorder %v595, %v628
    %vm648 = vcmp.eq.f32.partialorder %v596, %v631
    %vm649 = vcmp.eq.f32.partialorder %v597, %v634
    %vm650 = vcmp.eq.f32.partialorder %v598, %v637
    %vm651 = vmand %vm638, %vm416
    %vm652 = vmand %vm639, %vm416
    %vm653 = vmand %vm640, %vm416
    %vm654 = vmand %vm641, %vm416
    %vm655 = vmand %vm642, %vm416
    %vm656 = vmand %vm643, %vm416
    %vm657 = vmand %vm644, %vm416
    %vm658 = vmand %vm645, %vm416
    %vm659 = vmand %vm646, %vm416
    %vm660 = vmand %vm647, %vm416
    %vm661 = vmand %vm648, %vm416
    %vm662 = vmand %vm649, %vm416
    %vm663 = vmand %vm650, %vm416
    %v664 = vsel %vm651, %v39, 96
    %v665 = vsel %vm652, %v39, 96
    %v666 = vsel %vm653, %v39, 96
    %v667 = vsel %vm654, %v39, 96
    %v668 = vsel %vm655, %v39, 96
    %v669 = vsel %vm656, %v39, 96
    %v670 = vsel %vm657, %v39, 96
    %v671 = vsel %vm658, %v39, 96
    %v672 = vsel %vm659, %v39, 96
    %v673 = vsel %vm660, %v39, 96
    %v674 = vsel %vm661, %v39, 96
    %v675 = vsel %vm662, %v39, 96
    %v676 = vsel %vm663, %v39, 96
    %v677 = vsel %vm371, %v664, 2147483647
    %v678 = vand.u32 %v677, 65535
    %v679 = vshra.s32 %v677, 16
    %v680 = vcvt.s32.f32 %v678
    %v681 = vcvt.s32.f32 %v679
    %682 = vmin.xlane.f32.xlu0 %v681
    %v683 = vpop.xlane.xlu0 %682
    %vm684 = vcmp.eq.f32.partialorder %v681, %v683
    %v685 = vsel %vm684, %v680, inf
    %686 = vmin.xlane.f32.xlu0 %v685
    %v687 = vpop.xlane.xlu0 %686
    %v688 = vcvt.f32.s32 %v687
    %v689 = vcvt.f32.s32 %v683
    %v690 = vshll.u32 %v689, 16
    %v691 = vadd.s32 %v690, %v688
    %v692 = vsel %vm371, %v665, 2147483647
    %v693 = vand.u32 %v692, 65535
    %v694 = vshra.s32 %v692, 16
    %v695 = vcvt.s32.f32 %v693
    %v696 = vcvt.s32.f32 %v694
    %697 = vmin.xlane.f32.xlu0 %v696
    %v698 = vpop.xlane.xlu0 %697
    %vm699 = vcmp.eq.f32.partialorder %v696, %v698
    %v700 = vsel %vm699, %v695, inf
    %701 = vmin.xlane.f32.xlu0 %v700
    %v702 = vpop.xlane.xlu0 %701
    %v703 = vcvt.f32.s32 %v702
    %v704 = vcvt.f32.s32 %v698
    %v705 = vshll.u32 %v704, 16
    %v706 = vadd.s32 %v705, %v703
    %v707 = vsel %vm371, %v666, 2147483647
    %v708 = vand.u32 %v707, 65535
    %v709 = vshra.s32 %v707, 16
    %v710 = vcvt.s32.f32 %v708
    %v711 = vcvt.s32.f32 %v709
    %712 = vmin.xlane.f32.xlu0 %v711
    %v713 = vpop.xlane.xlu0 %712
    %vm714 = vcmp.eq.f32.partialorder %v711, %v713
    %v715 = vsel %vm714, %v710, inf
    %716 = vmin.xlane.f32.xlu0 %v715
    %v717 = vpop.xlane.xlu0 %716
    %v718 = vcvt.f32.s32 %v717
    %v719 = vcvt.f32.s32 %v713
    %v720 = vshll.u32 %v719, 16
    %v721 = vadd.s32 %v720, %v718
    %v722 = vsel %vm371, %v667, 2147483647
    %v723 = vand.u32 %v722, 65535
    %v724 = vshra.s32 %v722, 16
    %v725 = vcvt.s32.f32 %v723
    %v726 = vcvt.s32.f32 %v724
    %727 = vmin.xlane.f32.xlu0 %v726
    %v728 = vpop.xlane.xlu0 %727
    %vm729 = vcmp.eq.f32.partialorder %v726, %v728
    %v730 = vsel %vm729, %v725, inf
    %731 = vmin.xlane.f32.xlu0 %v730
    %v732 = vpop.xlane.xlu0 %731
    %v733 = vcvt.f32.s32 %v732
    %v734 = vcvt.f32.s32 %v728
    %v735 = vshll.u32 %v734, 16
    %v736 = vadd.s32 %v735, %v733
    %v737 = vsel %vm371, %v668, 2147483647
    %v738 = vand.u32 %v737, 65535
    %v739 = vshra.s32 %v737, 16
    %v740 = vcvt.s32.f32 %v738
    %v741 = vcvt.s32.f32 %v739
    %742 = vmin.xlane.f32.xlu0 %v741
    %v743 = vpop.xlane.xlu0 %742
    %vm744 = vcmp.eq.f32.partialorder %v741, %v743
    %v745 = vsel %vm744, %v740, inf
    %746 = vmin.xlane.f32.xlu0 %v745
    %v747 = vpop.xlane.xlu0 %746
    %v748 = vcvt.f32.s32 %v747
    %v749 = vcvt.f32.s32 %v743
    %v750 = vshll.u32 %v749, 16
    %v751 = vadd.s32 %v750, %v748
    %v752 = vsel %vm371, %v669, 2147483647
    %v753 = vand.u32 %v752, 65535
    %v754 = vshra.s32 %v752, 16
    %v755 = vcvt.s32.f32 %v753
    %v756 = vcvt.s32.f32 %v754
    %757 = vmin.xlane.f32.xlu0 %v756
    %v758 = vpop.xlane.xlu0 %757
    %vm759 = vcmp.eq.f32.partialorder %v756, %v758
    %v760 = vsel %vm759, %v755, inf
    %761 = vmin.xlane.f32.xlu0 %v760
    %v762 = vpop.xlane.xlu0 %761
    %v763 = vcvt.f32.s32 %v762
    %v764 = vcvt.f32.s32 %v758
    %v765 = vshll.u32 %v764, 16
    %v766 = vadd.s32 %v765, %v763
    %v767 = vsel %vm371, %v670, 2147483647
    %v768 = vand.u32 %v767, 65535
    %v769 = vshra.s32 %v767, 16
    %v770 = vcvt.s32.f32 %v768
    %v771 = vcvt.s32.f32 %v769
    %772 = vmin.xlane.f32.xlu0 %v771
    %v773 = vpop.xlane.xlu0 %772
    %vm774 = vcmp.eq.f32.partialorder %v771, %v773
    %v775 = vsel %vm774, %v770, inf
    %776 = vmin.xlane.f32.xlu0 %v775
    %v777 = vpop.xlane.xlu0 %776
    %v778 = vcvt.f32.s32 %v777
    %v779 = vcvt.f32.s32 %v773
    %v780 = vshll.u32 %v779, 16
    %v781 = vadd.s32 %v780, %v778
    %v782 = vsel %vm371, %v671, 2147483647
    %v783 = vand.u32 %v782, 65535
    %v784 = vshra.s32 %v782, 16
    %v785 = vcvt.s32.f32 %v783
    %v786 = vcvt.s32.f32 %v784
    %787 = vmin.xlane.f32.xlu0 %v786
    %v788 = vpop.xlane.xlu0 %787
    %vm789 = vcmp.eq.f32.partialorder %v786, %v788
    %v790 = vsel %vm789, %v785, inf
    %791 = vmin.xlane.f32.xlu0 %v790
    %v792 = vpop.xlane.xlu0 %791
    %v793 = vcvt.f32.s32 %v792
    %v794 = vcvt.f32.s32 %v788
    %v795 = vshll.u32 %v794, 16
    %v796 = vadd.s32 %v795, %v793
    %v797 = vsel %vm371, %v672, 2147483647
    %v798 = vand.u32 %v797, 65535
    %v799 = vshra.s32 %v797, 16
    %v800 = vcvt.s32.f32 %v798
    %v801 = vcvt.s32.f32 %v799
    %802 = vmin.xlane.f32.xlu0 %v801
    %v803 = vpop.xlane.xlu0 %802
    %vm804 = vcmp.eq.f32.partialorder %v801, %v803
    %v805 = vsel %vm804, %v800, inf
    %806 = vmin.xlane.f32.xlu0 %v805
    %v807 = vpop.xlane.xlu0 %806
    %v808 = vcvt.f32.s32 %v807
    %v809 = vcvt.f32.s32 %v803
    %v810 = vshll.u32 %v809, 16
    %v811 = vadd.s32 %v810, %v808
    %v812 = vsel %vm371, %v673, 2147483647
    %v813 = vand.u32 %v812, 65535
    %v814 = vshra.s32 %v812, 16
    %v815 = vcvt.s32.f32 %v813
    %v816 = vcvt.s32.f32 %v814
    %817 = vmin.xlane.f32.xlu0 %v816
    %v818 = vpop.xlane.xlu0 %817
    %vm819 = vcmp.eq.f32.partialorder %v816, %v818
    %v820 = vsel %vm819, %v815, inf
    %821 = vmin.xlane.f32.xlu0 %v820
    %v822 = vpop.xlane.xlu0 %821
    %v823 = vcvt.f32.s32 %v822
    %v824 = vcvt.f32.s32 %v818
    %v825 = vshll.u32 %v824, 16
    %v826 = vadd.s32 %v825, %v823
    %v827 = vsel %vm371, %v674, 2147483647
    %v828 = vand.u32 %v827, 65535
    %v829 = vshra.s32 %v827, 16
    %v830 = vcvt.s32.f32 %v828
    %v831 = vcvt.s32.f32 %v829
    %832 = vmin.xlane.f32.xlu0 %v831
    %v833 = vpop.xlane.xlu0 %832
    %vm834 = vcmp.eq.f32.partialorder %v831, %v833
    %v835 = vsel %vm834, %v830, inf
    %836 = vmin.xlane.f32.xlu0 %v835
    %v837 = vpop.xlane.xlu0 %836
    %v838 = vcvt.f32.s32 %v837
    %v839 = vcvt.f32.s32 %v833
    %v840 = vshll.u32 %v839, 16
    %v841 = vadd.s32 %v840, %v838
    %v842 = vsel %vm371, %v675, 2147483647
    %v843 = vand.u32 %v842, 65535
    %v844 = vshra.s32 %v842, 16
    %v845 = vcvt.s32.f32 %v843
    %v846 = vcvt.s32.f32 %v844
    %847 = vmin.xlane.f32.xlu0 %v846
    %v848 = vpop.xlane.xlu0 %847
    %vm849 = vcmp.eq.f32.partialorder %v846, %v848
    %v850 = vsel %vm849, %v845, inf
    %851 = vmin.xlane.f32.xlu0 %v850
    %v852 = vpop.xlane.xlu0 %851
    %v853 = vcvt.f32.s32 %v852
    %v854 = vcvt.f32.s32 %v848
    %v855 = vshll.u32 %v854, 16
    %v856 = vadd.s32 %v855, %v853
    %v857 = vsel %vm408, %v676, 2147483647
    %v858 = vand.u32 %v857, 65535
    %v859 = vshra.s32 %v857, 16
    %v860 = vcvt.s32.f32 %v858
    %v861 = vcvt.s32.f32 %v859
    %862 = vmin.xlane.f32.xlu0 %v861
    %v863 = vpop.xlane.xlu0 %862
    %vm864 = vcmp.eq.f32.partialorder %v861, %v863
    %v865 = vsel %vm864, %v860, inf
    %866 = vmin.xlane.f32.xlu0 %v865
    %v867 = vpop.xlane.xlu0 %866
    %v868 = vcvt.f32.s32 %v867
    %v869 = vcvt.f32.s32 %v863
    %v870 = vshll.u32 %v869, 16
    %v871 = vadd.s32 %v870, %v868
    %vm872 = vcmp.eq.s32.totalorder %v39, %v691
    %vm873 = vcmp.eq.s32.totalorder %v39, %v706
    %vm874 = vcmp.eq.s32.totalorder %v39, %v721
    %vm875 = vcmp.eq.s32.totalorder %v39, %v736
    %vm876 = vcmp.eq.s32.totalorder %v39, %v751
    %vm877 = vcmp.eq.s32.totalorder %v39, %v766
    %vm878 = vcmp.eq.s32.totalorder %v39, %v781
    %vm879 = vcmp.eq.s32.totalorder %v39, %v796
    %vm880 = vcmp.eq.s32.totalorder %v39, %v811
    %vm881 = vcmp.eq.s32.totalorder %v39, %v826
    %vm882 = vcmp.eq.s32.totalorder %v39, %v841
    %vm883 = vcmp.eq.s32.totalorder %v39, %v856
    %vm884 = vcmp.eq.s32.totalorder %v39, %v871
    %v885 = vsel %vm872, %v12, 0.0
    %v886 = vsel %vm873, %v13, 0.0
    %v887 = vsel %vm874, %v14, 0.0
    %v888 = vsel %vm875, %v15, 0.0
    %v889 = vsel %vm876, %v16, 0.0
    %v890 = vsel %vm877, %v17, 0.0
    %v891 = vsel %vm878, %v18, 0.0
    %v892 = vsel %vm879, %v19, 0.0
    %v893 = vsel %vm880, %v20, 0.0
    %v894 = vsel %vm881, %v21, 0.0
    %v895 = vsel %vm882, %v22, 0.0
    %v896 = vsel %vm883, %v23, 0.0
    %v897 = vsel %vm884, %v24, 0.0
    %v898 = vsel %vm371, %v885, 0.0
    %899 = vadd.xlane.f32.xlu0 %v898
    %v900 = vpop.xlane.xlu0 %899
    %v901 = vsel %vm371, %v886, 0.0
    %902 = vadd.xlane.f32.xlu0 %v901
    %v903 = vpop.xlane.xlu0 %902
    %v904 = vsel %vm371, %v887, 0.0
    %905 = vadd.xlane.f32.xlu0 %v904
    %v906 = vpop.xlane.xlu0 %905
    %v907 = vsel %vm371, %v888, 0.0
    %908 = vadd.xlane.f32.xlu0 %v907
    %v909 = vpop.xlane.xlu0 %908
    %v910 = vsel %vm371, %v889, 0.0
    %911 = vadd.xlane.f32.xlu0 %v910
    %v912 = vpop.xlane.xlu0 %911
    %v913 = vsel %vm371, %v890, 0.0
    %914 = vadd.xlane.f32.xlu0 %v913
    %v915 = vpop.xlane.xlu0 %914
    %v916 = vsel %vm371, %v891, 0.0
    %917 = vadd.xlane.f32.xlu0 %v916
    %v918 = vpop.xlane.xlu0 %917
    %v919 = vsel %vm371, %v892, 0.0
    %920 = vadd.xlane.f32.xlu0 %v919
    %v921 = vpop.xlane.xlu0 %920
    %v922 = vsel %vm371, %v893, 0.0
    %923 = vadd.xlane.f32.xlu0 %v922
    %v924 = vpop.xlane.xlu0 %923
    %v925 = vsel %vm371, %v894, 0.0
    %926 = vadd.xlane.f32.xlu0 %v925
    %v927 = vpop.xlane.xlu0 %926
    %v928 = vsel %vm371, %v895, 0.0
    %929 = vadd.xlane.f32.xlu0 %v928
    %v930 = vpop.xlane.xlu0 %929
    %v931 = vsel %vm371, %v896, 0.0
    %932 = vadd.xlane.f32.xlu0 %v931
    %v933 = vpop.xlane.xlu0 %932
    %v934 = vsel %vm408, %v897, 0.0
    %935 = vadd.xlane.f32.xlu0 %v934
    %v936 = vpop.xlane.xlu0 %935
    %v937 = vsub.f32 %v573, %v900
    %v938 = vsub.f32 %v574, %v903
    %v939 = vsub.f32 %v575, %v906
    %v940 = vsub.f32 %v576, %v909
    %v941 = vsub.f32 %v577, %v912
    %v942 = vsub.f32 %v578, %v915
    %v943 = vsub.f32 %v579, %v918
    %v944 = vsub.f32 %v580, %v921
    %v945 = vsub.f32 %v581, %v924
    %v946 = vsub.f32 %v582, %v927
    %v947 = vsub.f32 %v583, %v930
    %v948 = vsub.f32 %v584, %v933
    %v949 = vsub.f32 %v585, %v936
    %v950 = vadd.f32 %v374, %v377
    %v951 = vadd.f32 %v950, %v380
    %v952 = vadd.f32 %v951, %v383
    %v953 = vadd.f32 %v952, %v386
    %v954 = vadd.f32 %v953, %v389
    %v955 = vadd.f32 %v954, %v392
    %v956 = vadd.f32 %v955, %v395
    %v957 = vadd.f32 %v956, %v398
    %v958 = vadd.f32 %v957, %v401
    %v959 = vadd.f32 %v958, %v404
    %v960 = vadd.f32 %v959, %v407
    %vm961 = vcmask 1041408
    %v962 = vsel %vm961, %v411, 0.0
    %v963 = vadd.f32 %v960, %v962
    %v964 = vrot.slane %v963, 4
    %v965 = vadd.f32 %v963, %v964
    %v966 = vrot.slane %v965, 2
    %v967 = vadd.f32 %v965, %v966
    %v968 = vrot.slane %v967, 1
    %v969 = vadd.f32 %v967, %v968
    %v970 = vsel %vm40, %v937, 0.0
    %v971 = vsel %vm41, %v938, 0.0
    %v972 = vsel %vm42, %v939, 0.0
    %v973 = vsel %vm43, %v940, 0.0
    %v974 = vsel %vm44, %v941, 0.0
    %v975 = vsel %vm45, %v942, 0.0
    %v976 = vsel %vm46, %v943, 0.0
    %v977 = vsel %vm47, %v944, 0.0
    %v978 = vsel %vm48, %v945, 0.0
    %v979 = vsel %vm49, %v946, 0.0
    %v980 = vsel %vm50, %v947, 0.0
    %v981 = vsel %vm51, %v948, 0.0
    %v982 = vsel %vm52, %v949, 0.0
    %vm983 = vcmask 39968
    %v984 = vsel %vm983, %v970, 0.0
    %v985 = vsel %vm983, %v971, 0.0
    %v986 = vadd.f32 %v984, %v985
    %v987 = vsel %vm983, %v972, 0.0
    %v988 = vadd.f32 %v986, %v987
    %v989 = vsel %vm983, %v973, 0.0
    %v990 = vadd.f32 %v988, %v989
    %v991 = vsel %vm983, %v974, 0.0
    %v992 = vadd.f32 %v990, %v991
    %v993 = vsel %vm983, %v975, 0.0
    %v994 = vadd.f32 %v992, %v993
    %v995 = vsel %vm983, %v976, 0.0
    %v996 = vadd.f32 %v994, %v995
    %v997 = vsel %vm983, %v977, 0.0
    %v998 = vadd.f32 %v996, %v997
    %v999 = vsel %vm983, %v978, 0.0
    %v1000 = vadd.f32 %v998, %v999
    %v1001 = vsel %vm983, %v979, 0.0
    %v1002 = vadd.f32 %v1000, %v1001
    %v1003 = vsel %vm983, %v980, 0.0
    %v1004 = vadd.f32 %v1002, %v1003
    %v1005 = vsel %vm983, %v981, 0.0
    %v1006 = vadd.f32 %v1004, %v1005
    %vm1007 = vcmask 33824
    %v1008 = vsel %vm1007, %v982, 0.0
    %v1009 = vadd.f32 %v1006, %v1008
    %v1010 = vrot.slane %v1009, 4
    %v1011 = vadd.f32 %v1009, %v1010
    %v1012 = vrot.slane %v1011, 2
    %v1013 = vadd.f32 %v1011, %v1012
    %v1014 = vrot.slane %v1013, 1
    %v1015 = vadd.f32 %v1013, %v1014
    %v1016 = vsel %vm983, %v79, 0.0
    %v1017 = vsel %vm983, %v80, 0.0
    %v1018 = vadd.f32 %v1016, %v1017
    %v1019 = vsel %vm983, %v81, 0.0
    %v1020 = vadd.f32 %v1018, %v1019
    %v1021 = vsel %vm983, %v82, 0.0
    %v1022 = vadd.f32 %v1020, %v1021
    %v1023 = vsel %vm983, %v83, 0.0
    %v1024 = vadd.f32 %v1022, %v1023
    %v1025 = vsel %vm983, %v84, 0.0
    %v1026 = vadd.f32 %v1024, %v1025
    %v1027 = vsel %vm983, %v85, 0.0
    %v1028 = vadd.f32 %v1026, %v1027
    %v1029 = vsel %vm983, %v86, 0.0
    %v1030 = vadd.f32 %v1028, %v1029
    %v1031 = vsel %vm983, %v87, 0.0
    %v1032 = vadd.f32 %v1030, %v1031
    %v1033 = vsel %vm983, %v88, 0.0
    %v1034 = vadd.f32 %v1032, %v1033
    %v1035 = vsel %vm983, %v89, 0.0
    %v1036 = vadd.f32 %v1034, %v1035
    %v1037 = vsel %vm983, %v90, 0.0
    %v1038 = vadd.f32 %v1036, %v1037
    %v1039 = vsel %vm1007, %v91, 0.0
    %v1040 = vadd.f32 %v1038, %v1039
    %v1041 = vrot.slane %v1040, 4
    %v1042 = vadd.f32 %v1040, %v1041
    %v1043 = vrot.slane %v1042, 2
    %v1044 = vadd.f32 %v1042, %v1043
    %v1045 = vrot.slane %v1044, 1
    %v1046 = vadd.f32 %v1044, %v1045
    %vm1047 = vcmp.eq.s32.totalorder %v39, 0
    %v1048 = vsel %vm1047, %v969, 0.0
    %vm1049 = vcmp.eq.s32.totalorder %v39, 1
    %1051 = vset.pattern.permute.xlu0 4
    %1052 = vperm.xlu0 %1051, %v1015
    %v1053 = vpop.permute.xlu0 %1052
    %v1055 = vsel %vm1049, %v1053, 0.0
    %v1056 = vadd.f32 %v1048, %v1055
    %vm1057 = vcmp.eq.s32.totalorder %v39, 2
    %1059 = vset.pattern.permute.xlu0 4
    %1060 = vperm.xlu0 %1059, %v1046
    %v1061 = vpop.permute.xlu0 %1060
    %v1063 = vsel %vm1057, %v1061, 0.0
    %v1064 = vadd.f32 %v1056, %v1063
    %1065 = vst [vmem:[#allocation2] sm:$0x1] %v1064
    // Predicated region
    $region10: #{tpu_custom_call.1} parent=1 // pred_check
      _
    $region11: #{tpu_custom_call.1} parent=1 // pred_check_branch
      %1067 = sbr.rel (0) target = $region13
    $region12: #{tpu_custom_call.1} parent=1 // pred_region
      %s1069 = ssub.s32 16, 16
      %1070 = vsyncadd [#allocation3], %s1069
      %s1072 = sshll.u32 [#allocation2], 4
      %s1073 = int_to_ptr.vmem [resolvable:$true] %s1072
      %1075 = dma.vmem_to_hbm [thread:$0]  %s1073, 16, %s2, [#allocation3]
    $region13: #{tpu_custom_call.1} parent=1 // pred_fallthru
      _
    // Predicated region
    $region14: #{tpu_custom_call.1} parent=1 // pred_check
      _
    $region15: #{tpu_custom_call.1} parent=1 // pred_check_branch
      %1077 = sbr.rel (0) target = $region17
    $region16: #{tpu_custom_call.1} parent=1 // pred_region
      %1078 = dma.done [#allocation3], 16
    $region17: #{tpu_custom_call.1} parent=1 // pred_fallthru
      _
    %1079 = vsyncpa [#allocation3], 1

</llo_original>
